<compile_context>
chip_gen: v7x
topology: tpu7x:2x2x1
jax: 0.10.0
libtpu: 0.0.40
codegen_flags: <defaults>
</compile_context>

<pallas_src>
import functools
import math

import jax
import jax.numpy as jnp
import numpy as np
from jax.experimental import pallas as pl
from jax.experimental.pallas import tpu as pltpu


def _round_up(x, m):
    return ((x + m - 1) // m) * m


def _glimpse_decoder_kernel(x_ref, w_ref, bn_ref, out_ref, *, out_w, hw, max_off):
    """ConvTranspose2d(128->1, k=3, s=1, bias=False) + BatchNorm2d(1) (training-mode stats).

    x_ref  : (TB, 128, L2) VMEM  batch tile; spatial flattened with row stride out_w=w+2,
                                 embedded at lane offset `max_off` inside zero-padded rows.
    w_ref  : (9, 128)      VMEM  tap-major conv weight: w_ref[kh*3+kw, c] = W[c, 0, kh, kw].
    bn_ref : (3,)          SMEM  [gamma, beta, eps].
    out_ref: (B, 1, Lrow)  VMEM  full "wide" output, resident across the whole grid.
    """
    i = pl.program_id(0)
    nb = pl.num_programs(0)
    tb, c, _ = x_ref.shape
    full_b, _, lrow = out_ref.shape

    # ---- transposed conv: one batched K=128 contraction on the MXU -----------------
    # taps[b, t, p] = sum_c W[c, 0, kh, kw] * x[b, c, p],  t = kh*3 + kw
    w_b = jnp.broadcast_to(w_ref[...][None, :, :], (tb, 9, c))
    taps = jax.lax.dot_general(
        w_b, x_ref[...],
        dimension_numbers=(((2,), (1,)), ((0,), (0,))),
        preferred_element_type=jnp.float32)                      # (TB, 9, L2)

    # ---- combine the 9 taps: out[q] = sum_t taps[t, q - off_t] ---------------------
    # The input row was embedded at lane offset max_off, so tap t is read from the
    # static lane window [max_off - off_t, max_off - off_t + Lrow). Boundary taps read
    # zero-padded lanes, so no masking is needed.
    acc = jnp.zeros((tb, 1, lrow), jnp.float32)
    for kh in range(3):
        for kw in range(3):
            t = kh * 3 + kw
            start = max_off - (kh * out_w + kw)
            acc = acc + taps[:, t:t + 1, start:start + lrow]
    out_ref[pl.ds(i * tb, tb), :, :] = acc

    # ---- BatchNorm2d(1): training-mode batch stats, fused into the last grid step --
    # TODO(synk): BatchNorm running_mean/running_var buffer updates (training side
    # effect) are not emitted; the forward output is unaffected.
    @pl.when(i == nb - 1)
    def _():
        gamma = bn_ref[0]
        beta = bn_ref[1]
        eps = bn_ref[2]
        y = out_ref[...]                        # (B, 1, Lrow): all tiles now written
        yv = y[:, :, :hw]                       # valid output pixels only
        n = full_b * hw
        mean = jnp.sum(yv) / n
        cent = yv - mean
        var = jnp.sum(cent * cent) / n          # biased variance (PyTorch training mode)
        inv_std = jax.lax.rsqrt(var + eps)
        out_ref[...] = ((y - mean) * inv_std * gamma + beta).astype(out_ref.dtype)


def glimpse_decoder_forward(x, conv_weight, gamma, beta, h, w, eps=1e-5, block_b=None):
    """x: (B, 128*h*w) float32.  conv_weight: (128, 1, 3, 3) (PyTorch in/out/kH/kW layout).
    Returns (B, 1, h+2, w+2) NCHW, matching GlimpseDecoder.forward (BN in training mode)."""
    B = x.shape[0]
    C = 128
    Hout, Wout = h + 2, w + 2
    HW = Hout * Wout                    # valid output pixels per image
    P = h * Wout                        # flattened (row-stride-Wout) input length
    max_off = 2 * Wout + 2              # largest tap offset kh*Wout + kw
    Lrow = _round_up(HW, 128)           # lane-dense output row length
    L2 = _round_up(max_off + Lrow, 128)  # lane-dense padded input row length

    if block_b is None:
        block_b = next(d for d in (8, 4, 2, 1) if B % d == 0)
    assert B % block_b == 0
    nb = B // block_b

    # NCHW view -> pad 2 zero columns per row (row stride becomes Wout) -> flatten
    # spatial -> embed at lane offset max_off inside an L2-long zero row.
    x4 = x.reshape(B, C, h, w)
    xw = jnp.pad(x4, ((0, 0), (0, 0), (0, 0), (0, 2))).reshape(B, C, P)
    x_in = jnp.pad(xw, ((0, 0), (0, 0), (max_off, L2 - max_off - P)))

    # Tap-major conv weight: w9[kh*3+kw, c] = W[c, 0, kh, kw] (no spatial flip needed in
    # the scatter formulation of ConvTranspose2d).
    w9 = jnp.transpose(conv_weight[:, 0, :, :].reshape(C, 9), (1, 0))

    bn = jnp.array([gamma, beta, eps], dtype=jnp.float32)

    kernel = functools.partial(_glimpse_decoder_kernel, out_w=Wout, hw=HW, max_off=max_off)

    out = pl.pallas_call(
        kernel,
        out_shape=jax.ShapeDtypeStruct((B, 1, Lrow), jnp.float32),
        grid_spec=pltpu.PrefetchScalarGridSpec(
            num_scalar_prefetch=0,
            grid=(nb,),
            in_specs=[
                pl.BlockSpec((block_b, C, L2), lambda i: (i, 0, 0)),     # batch tile
                pl.BlockSpec((9, C), lambda i: (0, 0)),                  # conv weight
                pl.BlockSpec(memory_space=pltpu.MemorySpace.SMEM),       # [gamma, beta, eps]
            ],
            out_specs=pl.BlockSpec((B, 1, Lrow), lambda i: (0, 0, 0)),   # resident wide output
        ),
        compiler_params=pltpu.CompilerParams(
            dimension_semantics=("arbitrary",)),
    )(x_in, w9, bn)

    # Un-pad / un-flatten in the wrapper (free XLA ops): (B, 1, Lrow) -> (B, 1, h+2, w+2).
    return out[:, :, :HW].reshape(B, 1, Hout, Wout)


def _reference_forward(x, conv_weight, gamma, beta, h, w, eps=1e-5):
    """Pure-JAX reference mirroring PyTorch semantics (NCHW throughout)."""
    B = x.shape[0]
    x_nchw = x.reshape(B, 128, h, w)
    # ConvTranspose2d(stride=1, pad=0) == conv with OIHW = transposed, spatially-flipped W, pad 2.
    w_oihw = jnp.flip(jnp.transpose(conv_weight, (1, 0, 2, 3)), axis=(2, 3))  # (1, 128, 3, 3)
    y = jax.lax.conv_general_dilated(
        x_nchw, w_oihw, window_strides=(1, 1), padding=((2, 2), (2, 2)),
        dimension_numbers=("NCHW", "OIHW", "NCHW"),
        precision=jax.lax.Precision.HIGHEST)
    mean = jnp.mean(y)
    var = jnp.mean((y - mean) ** 2)
    return (y - mean) / jnp.sqrt(var + eps) * gamma + beta


if __name__ == "__main__":
    # Small, shape-consistent example: h = w = 6, batch = 4 (so the batch grid has 2 steps).
    h, w = 6, 6
    B = 4

    key = jax.random.PRNGKey(0)
    k_x, k_w = jax.random.split(key)

    # Latent input that GlimpseDecoder.forward views as (B, 128, h, w).
    x = jax.random.normal(k_x, (B, 128 * h * w), dtype=jnp.float32)

    # ConvTranspose2d(128, 1, 3) weight, Xavier-uniform init, PyTorch layout (in, out, kH, kW).
    fan_in, fan_out = 1 * 3 * 3, 128 * 3 * 3
    bound = math.sqrt(6.0 / (fan_in + fan_out))
    conv_weight = jax.random.uniform(k_w, (128, 1, 3, 3), jnp.float32, -bound, bound)

    # BatchNorm2d(1) parameters at their PyTorch init values.
    gamma, beta = 1.0, 0.0

    out = glimpse_decoder_forward(x, conv_weight, gamma, beta, h, w, block_b=2)
    out = jax.block_until_ready(out)

    ref = jax.block_until_ready(_reference_forward(x, conv_weight, gamma, beta, h, w))

    assert out.shape == (B, 1, h + 2, w + 2), out.shape
    np.testing.assert_allclose(np.asarray(out), np.asarray(ref), rtol=1e-3, atol=1e-3)

    print("KERNEL_OK")
</pallas_src>

<mosaic_0001>
module attributes {stable_mosaic.version = 11 : i64} {
  func.func @_glimpse_decoder_kernel(%arg0: i32, %arg1: memref<2x128x256xf32, #tpu.memory_space<vmem>>, %arg2: memref<9x128xf32, #tpu.memory_space<vmem>>, %arg3: memref<3xf32, #tpu.memory_space<smem>>, %arg4: memref<4x1x128xf32, #tpu.memory_space<vmem>>) attributes {dimension_semantics = [#tpu.dimension_semantics<arbitrary>], iteration_bounds = array<i64: 2>, scalar_prefetch = 0 : i64, scratch_operands = 0 : i64, tpu.core_type = #tpu.core_type<tc>, window_params = [{transform_indices = @transform_0, window_bounds = array<i64: 2, 128, 256>}, {pipeline_mode = #tpu.pipeline_mode<synchronous>, transform_indices = @transform_1, window_bounds = array<i64: 9, 128>}, {transform_indices = @transform_2, window_bounds = array<i64: 3>}, {pipeline_mode = #tpu.pipeline_mode<synchronous>, transform_indices = @transform_3, window_bounds = array<i64: 4, 1, 128>}]} {
    %c0 = arith.constant 0 : index
    %c0_0 = arith.constant 0 : index
    %0 = vector.load %arg2[%c0, %c0_0] : memref<9x128xf32, #tpu.memory_space<vmem>>, vector<9x128xf32>
    %1 = vector.shape_cast %0 : vector<9x128xf32> to vector<1x9x128xf32>
    %2 = vector.shape_cast %1 : vector<1x9x128xf32> to vector<1x9x128xf32>
    %3 = vector.broadcast %2 : vector<1x9x128xf32> to vector<2x9x128xf32>
    %c0_1 = arith.constant 0 : index
    %c0_2 = arith.constant 0 : index
    %c0_3 = arith.constant 0 : index
    %4 = vector.load %arg1[%c0_1, %c0_2, %c0_3] : memref<2x128x256xf32, #tpu.memory_space<vmem>>, vector<2x128x256xf32>
    %cst = arith.constant dense<0.000000e+00> : vector<2x9x256xf32>
    %5 = tpu.matmul %3, %4, %cst {dimension_numbers = #tpu.dot_dimension_numbers<[2], [1], [1], [2], [0, 0, 0, 1, 1, 2], [0], [0]>} : vector<2x9x128xf32>, vector<2x128x256xf32>, vector<2x9x256xf32> -> vector<2x9x256xf32>
    %cst_4 = arith.constant 0.000000e+00 : f32
    %6 = vector.broadcast %cst_4 : f32 to vector<2x1x128xf32>
    %7 = vector.extract_strided_slice %5 {offsets = [0, 0, 18], sizes = [2, 1, 128], strides = [1, 1, 1]} : vector<2x9x256xf32> to vector<2x1x128xf32>
    %8 = arith.addf %6, %7 : vector<2x1x128xf32>
    %9 = vector.extract_strided_slice %5 {offsets = [0, 1, 17], sizes = [2, 1, 128], strides = [1, 1, 1]} : vector<2x9x256xf32> to vector<2x1x128xf32>
    %10 = arith.addf %8, %9 : vector<2x1x128xf32>
    %11 = vector.extract_strided_slice %5 {offsets = [0, 2, 16], sizes = [2, 1, 128], strides = [1, 1, 1]} : vector<2x9x256xf32> to vector<2x1x128xf32>
    %12 = arith.addf %10, %11 : vector<2x1x128xf32>
    %13 = vector.extract_strided_slice %5 {offsets = [0, 3, 10], sizes = [2, 1, 128], strides = [1, 1, 1]} : vector<2x9x256xf32> to vector<2x1x128xf32>
    %14 = arith.addf %12, %13 : vector<2x1x128xf32>
    %15 = vector.extract_strided_slice %5 {offsets = [0, 4, 9], sizes = [2, 1, 128], strides = [1, 1, 1]} : vector<2x9x256xf32> to vector<2x1x128xf32>
    %16 = arith.addf %14, %15 : vector<2x1x128xf32>
    %17 = vector.extract_strided_slice %5 {offsets = [0, 5, 8], sizes = [2, 1, 128], strides = [1, 1, 1]} : vector<2x9x256xf32> to vector<2x1x128xf32>
    %18 = arith.addf %16, %17 : vector<2x1x128xf32>
    %19 = vector.extract_strided_slice %5 {offsets = [0, 6, 2], sizes = [2, 1, 128], strides = [1, 1, 1]} : vector<2x9x256xf32> to vector<2x1x128xf32>
    %20 = arith.addf %18, %19 : vector<2x1x128xf32>
    %21 = vector.extract_strided_slice %5 {offsets = [0, 7, 1], sizes = [2, 1, 128], strides = [1, 1, 1]} : vector<2x9x256xf32> to vector<2x1x128xf32>
    %22 = arith.addf %20, %21 : vector<2x1x128xf32>
    %23 = vector.extract_strided_slice %5 {offsets = [0, 8, 0], sizes = [2, 1, 128], strides = [1, 1, 1]} : vector<2x9x256xf32> to vector<2x1x128xf32>
    %24 = arith.addf %22, %23 : vector<2x1x128xf32>
    %c2_i32 = arith.constant 2 : i32
    %25 = arith.muli %arg0, %c2_i32 : i32
    %26 = arith.index_cast %25 : i32 to index
    %c0_5 = arith.constant 0 : index
    %c0_6 = arith.constant 0 : index
    %27 = vector.load %arg4[%26, %c0_5, %c0_6] : memref<4x1x128xf32, #tpu.memory_space<vmem>>, vector<2x1x128xf32>
    tpu.vector_store %arg4[%26, %c0_5, %c0_6], %24 {strides = array<i32>} : memref<4x1x128xf32, #tpu.memory_space<vmem>>, vector<2x1x128xf32>,
    %c1_i32 = arith.constant 1 : i32
    %28 = arith.cmpi eq, %arg0, %c1_i32 : i32
    %29 = arith.extui %28 : i1 to i32
    %c0_i32 = arith.constant 0 : i32
    %30 = arith.cmpi ne, %29, %c0_i32 : i32
    scf.if %30 {
      %c0_7 = arith.constant 0 : index
      %31 = memref.load %arg3[%c0_7] : memref<3xf32, #tpu.memory_space<smem>>
      %c1 = arith.constant 1 : index
      %32 = memref.load %arg3[%c1] : memref<3xf32, #tpu.memory_space<smem>>
      %c2 = arith.constant 2 : index
      %33 = memref.load %arg3[%c2] : memref<3xf32, #tpu.memory_space<smem>>
      %c0_8 = arith.constant 0 : index
      %c0_9 = arith.constant 0 : index
      %c0_10 = arith.constant 0 : index
      %34 = vector.load %arg4[%c0_8, %c0_9, %c0_10] : memref<4x1x128xf32, #tpu.memory_space<vmem>>, vector<4x1x128xf32>
      %35 = vector.extract_strided_slice %34 {offsets = [0, 0, 0], sizes = [4, 1, 64], strides = [1, 1, 1]} : vector<4x1x128xf32> to vector<4x1x64xf32>
      %36 = vector.shape_cast %35 : vector<4x1x64xf32> to vector<1x4x1x64xf32>
      %cst_11 = arith.constant dense<0.000000e+00> : vector<1xf32>
      %37 = vector.multi_reduction <add>, %36, %cst_11 [1, 2, 3] : vector<1x4x1x64xf32> to vector<1xf32>
      %38 = vector.shape_cast %37 : vector<1xf32> to vector<1x1x1x1xf32>
      %39 = vector.extract %38[0, 0, 0, 0] : f32 from vector<1x1x1x1xf32>
      %cst_12 = arith.constant 2.560000e+02 : f32
      %40 = arith.divf %39, %cst_12 : f32
      %41 = vector.broadcast %40 : f32 to vector<4x1x64xf32>
      %42 = arith.subf %35, %41 : vector<4x1x64xf32>
      %43 = arith.mulf %42, %42 : vector<4x1x64xf32>
      %44 = vector.shape_cast %43 : vector<4x1x64xf32> to vector<1x4x1x64xf32>
      %cst_13 = arith.constant dense<0.000000e+00> : vector<1xf32>
      %45 = vector.multi_reduction <add>, %44, %cst_13 [1, 2, 3] : vector<1x4x1x64xf32> to vector<1xf32>
      %46 = vector.shape_cast %45 : vector<1xf32> to vector<1x1x1x1xf32>
      %47 = vector.extract %46[0, 0, 0, 0] : f32 from vector<1x1x1x1xf32>
      %cst_14 = arith.constant 2.560000e+02 : f32
      %48 = arith.divf %47, %cst_14 : f32
      %49 = arith.addf %48, %33 : f32
      %50 = math.rsqrt %49 : f32
      %51 = vector.broadcast %40 : f32 to vector<4x1x128xf32>
      %52 = arith.subf %34, %51 : vector<4x1x128xf32>
      %53 = vector.broadcast %50 : f32 to vector<4x1x128xf32>
      %54 = arith.mulf %52, %53 : vector<4x1x128xf32>
      %55 = vector.broadcast %31 : f32 to vector<4x1x128xf32>
      %56 = arith.mulf %54, %55 : vector<4x1x128xf32>
      %57 = vector.broadcast %32 : f32 to vector<4x1x128xf32>
      %58 = arith.addf %56, %57 : vector<4x1x128xf32>
      %c0_15 = arith.constant 0 : index
      %c0_16 = arith.constant 0 : index
      %c0_17 = arith.constant 0 : index
      %59 = vector.load %arg4[%c0_15, %c0_16, %c0_17] : memref<4x1x128xf32, #tpu.memory_space<vmem>>, vector<4x1x128xf32>
      tpu.vector_store %arg4[%c0_15, %c0_16, %c0_17], %58 {strides = array<i32>} : memref<4x1x128xf32, #tpu.memory_space<vmem>>, vector<4x1x128xf32>,
    } else {
    }
    return
  }
  func.func @transform_0(%arg0: i32) -> (i32, i32, i32) {
    %c0_i32 = arith.constant 0 : i32
    %c0_i32_0 = arith.constant 0 : i32
    %c0_i32_1 = arith.constant 0 : i32
    return %arg0, %c0_i32, %c0_i32_0 : i32, i32, i32
  }
  func.func @transform_1(%arg0: i32) -> (i32, i32) {
    %c0_i32 = arith.constant 0 : i32
    %c0_i32_0 = arith.constant 0 : i32
    %c0_i32_1 = arith.constant 0 : i32
    return %c0_i32, %c0_i32_0 : i32, i32
  }
  func.func @transform_2(%arg0: i32) -> i32 {
    %c0_i32 = arith.constant 0 : i32
    %c0_i32_0 = arith.constant 0 : i32
    return %c0_i32 : i32
  }
  func.func @transform_3(%arg0: i32) -> (i32, i32, i32) {
    %c0_i32 = arith.constant 0 : i32
    %c0_i32_0 = arith.constant 0 : i32
    %c0_i32_1 = arith.constant 0 : i32
    %c0_i32_2 = arith.constant 0 : i32
    return %c0_i32, %c0_i32_0, %c0_i32_1 : i32, i32, i32
  }
}

</mosaic_0001>

<llo_original>
// kernel: tpu_custom_call.1
$region0: #{tpu_custom_call.1}
  #allocation0 [shape = 'u32[]', space=smem, size = 0x4, offset = 0x4, fixed_abs, tag = 'smem constant byte address 0x4 - core index']
  #allocation1 [shape = 'u32[144,128]{1,0:T(1,128)}', space=vmem, size = 0x12000, scoped, tag = 'internal scratch']
  %s0 = inlined_call_operand.hbm [shape: f32[4,128,256], index: 0, kind: input, shape index: {}]
  %s1 = inlined_call_operand.hbm [shape: f32[9,128], index: 1, kind: input, shape index: {}]
  %s2 = inlined_call_operand.vmem [shape: f32[3], index: 2, kind: input, shape index: {}]
  %s3 = inlined_call_operand.hbm [shape: f32[4,1,128], index: 3, kind: output, shape index: {}]
  %s4 = sld [smem:[#allocation0]]
  $region61: #{tpu_custom_call.1} parent=0
    _
  %s6 = ssub.s32 1, %s4
  %s7 = scalar_select 0, %s6, %s4
  $region1: #{tpu_custom_call.1} parent=0
    #allocation2 [shape = 'u8[524288]{0}', space=vmem, size = 0x80000, scoped, tag = 'input window, operand 0']
    #allocation3 [shape = 's32[2]{0}', space=sflag, size = 0x8, scoped, tag = 'scoped memory for tpu_custom_call.1']
    #allocation4 [shape = 's32[2]{0}', space=sflag, size = 0x8, scoped, tag = 'scoped memory for tpu_custom_call.1']
    #allocation5 [shape = 's32[2]{0}', space=sflag, size = 0x8, scoped, tag = 'scoped memory for tpu_custom_call.1']
    #allocation6 [shape = 'u8[8192]{0}', space=vmem, size = 0x2000, scoped, tag = 'input window, operand 1, single buffered']
    #allocation7 [shape = 's32[1]{0}', space=sflag, size = 0x4, scoped, tag = 'scoped memory for tpu_custom_call.1']
    #allocation8 [shape = 'u8[512]{0}', space=smem, size = 0x200, scoped, tag = 'input window, operand 2, single buffered']
    #allocation9 [shape = 'u8[2048]{0}', space=vmem, size = 0x800, scoped, tag = 'output window, operand 0, single buffered']
    %8 = vsyncpa [#allocation3], 0
    %s9 = scalar_lea.sflag [#allocation3], 1
    %10 = vsyncpa %s9, 0
    %11 = vsyncpa [#allocation7], 0
    %12 = vsyncpa [#allocation5], 0
    %13 = vsyncpa [#allocation4], 0
    loop: start=0, step=1, limit=4
    $region2: #{tpu_custom_call.1} parent=1 // loop_pre_header
      _
    $region3: #{tpu_custom_call.1} parent=1 // loop_header
      %s15 = sphi 0, %s19
      %p16 = scmp.ge.s32.totalorder %s15, 4
      %s25 = sphi 0, %s27
      %s28 = sphi 0, %s25
      %s29 = sphi 0, %s28
      %s45 = sphi 0, %s29
      %s49 = sphi 0, %s49
      %s51 = sphi 0, %s49
      %s52 = sphi 0, %s51
      %s66 = sphi 0, %s52
      %s70 = sphi 0, %s70
      %s72 = sphi 0, %s70
      %s73 = sphi 0, %s72
      %s87 = sphi 0, %s73
      %s91 = sphi 0, %s91
      %s93 = sphi 0, %s91
      %s94 = sphi 0, %s93
      %s108 = sphi 0, %s94
    $region4: #{tpu_custom_call.1} parent=1 // loop_header_branch
      %18 = sbr.rel (%p16) target = $region8
    $region5: #{tpu_custom_call.1} parent=1 // loop_body
      %s20 = ssub.s32 %s15, 1
      %s21 = ssub.s32 %s15, 2
      %s22 = sadd.s32 %s15, 1
      %s23 = ssub.s32 %s15, %s22
      %p24 = scmp.eq.s32.totalorder %s23, 0
      %s26 = sadd.s32 %s25, 1
      %s27 = scalar_select %p24, %s25, %s26
      %p30 = pneg %p24
      %p31 = scmp.eq.s32.totalorder %s15, 1
      %p32 = por %p30, %p31
      %p33 = scmp.ne.s32.totalorder %s25, %s28
      %p34 = scmp.eq.s32.totalorder %s15, 0
      %p35 = por %p33, %p34
      %p36 = scmp.ne.s32.totalorder %s25, %s28
      %p37 = scmp.eq.s32.totalorder %s20, 1
      %p38 = por %p36, %p37
      %p39 = scmp.ne.s32.totalorder %s28, %s29
      %p40 = scmp.eq.s32.totalorder %s20, 0
      %p41 = por %p39, %p40
      %p42 = scmp.ne.s32.totalorder %s28, %s29
      %p43 = scmp.eq.s32.totalorder %s21, 1
      %p44 = por %p42, %p43
      %p46 = scmp.ne.s32.totalorder %s29, %s45
      %p47 = scmp.eq.s32.totalorder %s21, 0
      %p48 = por %p46, %p47
      %s50 = sadd.s32 %s49, 1
      %p53 = scmp.eq.s32.totalorder %s15, 1
      %p54 = scmp.ne.s32.totalorder %s49, %s51
      %p55 = scmp.eq.s32.totalorder %s15, 0
      %p56 = por %p54, %p55
      %p57 = scmp.ne.s32.totalorder %s49, %s51
      %p58 = scmp.eq.s32.totalorder %s20, 1
      %p59 = por %p57, %p58
      %p60 = scmp.ne.s32.totalorder %s51, %s52
      %p61 = scmp.eq.s32.totalorder %s20, 0
      %p62 = por %p60, %p61
      %p63 = scmp.ne.s32.totalorder %s51, %s52
      %p64 = scmp.eq.s32.totalorder %s21, 1
      %p65 = por %p63, %p64
      %p67 = scmp.ne.s32.totalorder %s52, %s66
      %p68 = scmp.eq.s32.totalorder %s21, 0
      %p69 = por %p67, %p68
      %s71 = sadd.s32 %s70, 1
      %p74 = scmp.eq.s32.totalorder %s15, 1
      %p75 = scmp.ne.s32.totalorder %s70, %s72
      %p76 = scmp.eq.s32.totalorder %s15, 0
      %p77 = por %p75, %p76
      %p78 = scmp.ne.s32.totalorder %s70, %s72
      %p79 = scmp.eq.s32.totalorder %s20, 1
      %p80 = por %p78, %p79
      %p81 = scmp.ne.s32.totalorder %s72, %s73
      %p82 = scmp.eq.s32.totalorder %s20, 0
      %p83 = por %p81, %p82
      %p84 = scmp.ne.s32.totalorder %s72, %s73
      %p85 = scmp.eq.s32.totalorder %s21, 1
      %p86 = por %p84, %p85
      %p88 = scmp.ne.s32.totalorder %s73, %s87
      %p89 = scmp.eq.s32.totalorder %s21, 0
      %p90 = por %p88, %p89
      %s92 = sadd.s32 %s91, 1
      %p95 = scmp.eq.s32.totalorder %s15, 1
      %p96 = scmp.ne.s32.totalorder %s91, %s93
      %p97 = scmp.eq.s32.totalorder %s15, 0
      %p98 = por %p96, %p97
      %p99 = scmp.ne.s32.totalorder %s91, %s93
      %p100 = scmp.eq.s32.totalorder %s20, 1
      %p101 = por %p99, %p100
      %p102 = scmp.ne.s32.totalorder %s93, %s94
      %p103 = scmp.eq.s32.totalorder %s20, 0
      %p104 = por %p102, %p103
      %p105 = scmp.ne.s32.totalorder %s93, %s94
      %p106 = scmp.eq.s32.totalorder %s21, 1
      %p107 = por %p105, %p106
      %p109 = scmp.ne.s32.totalorder %s94, %s108
      %p110 = scmp.eq.s32.totalorder %s21, 0
      %p111 = por %p109, %p110
      %p112 = scmp.le.s32.totalorder 1, %s15
      %p113 = scmp.lt.s32.totalorder %s15, 3
      %p114 = pnand %p112, %p113
      %p115 = pneg %p114
      // Predicated region
      $region9: #{tpu_custom_call.1} parent=5 // pred_check
        _
      $region10: #{tpu_custom_call.1} parent=5 // pred_check_branch
        %117 = sbr.rel (%p114) target = $region12
      $region11: #{tpu_custom_call.1} parent=5 // pred_region
        %s118 = ssub.s32 %s15, 1
        // Predicated region
        $region13: #{tpu_custom_call.1} parent=11 // pred_check
          %p119 = pneg %p62
        $region14: #{tpu_custom_call.1} parent=11 // pred_check_branch
          %121 = sbr.rel (%p119) target = $region16
        $region15: #{tpu_custom_call.1} parent=11 // pred_region
          %s123 = ssub.s32 256, 256
          %124 = vsyncadd [#allocation7], %s123
          %s125 = sshll.u32 [#allocation6], 4
          %s126 = int_to_ptr.vmem [resolvable:$true] %s125
          %131 = dma.hbm_to_vmem [thread:$0]  %s1, 256, %s126, [#allocation7], 128, 128, 8
        $region16: #{tpu_custom_call.1} parent=11 // pred_fallthru
          _
        // Predicated region
        $region17: #{tpu_custom_call.1} parent=11 // pred_check
          %p132 = pneg %p83
        $region18: #{tpu_custom_call.1} parent=11 // pred_check_branch
          %134 = sbr.rel (%p132) target = $region20
        $region19: #{tpu_custom_call.1} parent=11 // pred_region
          %s136 = ssub.s32 16, 16
          %137 = vsyncadd [#allocation5], %s136
          %s139 = sshll.u32 %s2, 4
          %s140 = int_to_ptr.vmem [resolvable:$true] %s139
          %142 = dma.vmem_to_smem %s140, 16, [#allocation8], [#allocation5]
        $region20: #{tpu_custom_call.1} parent=11 // pred_fallthru
          _
      $region12: #{tpu_custom_call.1} parent=5 // pred_fallthru
        _
      %p143 = scmp.lt.s32.totalorder %s15, 2
      // Predicated region
      $region21: #{tpu_custom_call.1} parent=5 // pred_check
        %p144 = pneg %p143
      $region22: #{tpu_custom_call.1} parent=5 // pred_check_branch
        %146 = sbr.rel (%p144) target = $region24
      $region23: #{tpu_custom_call.1} parent=5 // pred_region
        // Predicated region
        $region25: #{tpu_custom_call.1} parent=23 // pred_check
          %p147 = pneg %p35
        $region26: #{tpu_custom_call.1} parent=23 // pred_check_branch
          %149 = sbr.rel (%p147) target = $region28
        $region27: #{tpu_custom_call.1} parent=23 // pred_region
          %s150 = sand.u32 %s25, 1
          %s151 = scalar_lea.sflag [#allocation3], %s150
          %s152 = sand.u32 %s25, 1
          %s153 = smul.addr %s152, 512
          %s154 = scalar_lea.vmem [#allocation2], %s153
          %s155 = smul.u32 2, %s15
          %s157 = ssub.s32 8192, 8192
          %158 = vsyncadd %s151, %s157
          %s159 = smul.addr %s155, 32
          %s160 = smul.addr %s159, 128
          %s161 = scalar_lea.hbm %s0, %s160
          %s162 = sshll.u32 %s154, 4
          %s163 = int_to_ptr.vmem [resolvable:$true] %s162
          %168 = dma.hbm_to_vmem [thread:$0]  %s161, 8192, %s163, %s151, 256, 256, 16
        $region28: #{tpu_custom_call.1} parent=23 // pred_fallthru
          _
      $region24: #{tpu_custom_call.1} parent=5 // pred_fallthru
        _
      %p169 = scmp.le.s32.totalorder 1, %s15
      %p170 = scmp.lt.s32.totalorder %s15, 3
      %p171 = pnand %p169, %p170
      %p172 = pneg %p171
      // Predicated region
      $region29: #{tpu_custom_call.1} parent=5 // pred_check
        _
      $region30: #{tpu_custom_call.1} parent=5 // pred_check_branch
        %174 = sbr.rel (%p171) target = $region32
      $region31: #{tpu_custom_call.1} parent=5 // pred_region
        %s175 = ssub.s32 %s15, 1
        %s176 = sand.u32 %s28, 1
        %s177 = scalar_lea.sflag [#allocation3], %s176
        %s178 = sand.u32 %s28, 1
        %s179 = smul.addr %s178, 512
        %s180 = scalar_lea.vmem [#allocation2], %s179
        // Predicated region
        $region33: #{tpu_custom_call.1} parent=31 // pred_check
          %p181 = pneg %p41
        $region34: #{tpu_custom_call.1} parent=31 // pred_check_branch
          %183 = sbr.rel (%p181) target = $region36
        $region35: #{tpu_custom_call.1} parent=31 // pred_region
          %184 = dma.done %s177, 8192
        $region36: #{tpu_custom_call.1} parent=31 // pred_fallthru
          _
        // Predicated region
        $region37: #{tpu_custom_call.1} parent=31 // pred_check
          %p185 = pneg %p62
        $region38: #{tpu_custom_call.1} parent=31 // pred_check_branch
          %187 = sbr.rel (%p185) target = $region40
        $region39: #{tpu_custom_call.1} parent=31 // pred_region
          %188 = dma.done [#allocation7], 256
        $region40: #{tpu_custom_call.1} parent=31 // pred_fallthru
          _
        // Predicated region
        $region41: #{tpu_custom_call.1} parent=31 // pred_check
          %p189 = pneg %p83
        $region42: #{tpu_custom_call.1} parent=31 // pred_check_branch
          %191 = sbr.rel (%p189) target = $region44
        $region43: #{tpu_custom_call.1} parent=31 // pred_region
          %192 = dma.done [#allocation5], 16
        $region44: #{tpu_custom_call.1} parent=31 // pred_fallthru
          _
        %193 = sfence
        %s194 = sand.u32 %s28, 1
        %s195 = scalar_lea.sflag [#allocation3], %s194
        %s196 = sand.u32 %s28, 1
        %s197 = smul.addr %s196, 512
        %s198 = scalar_lea.vmem [#allocation2], %s197
        %p199 = pneg %p41
        %p200 = pneg %p38
        %p201 = pneg %p62
        %p202 = pneg %p59
        %p203 = pneg %p83
        %p204 = pneg %p80
        %p205 = pneg %p104
        %p206 = pneg %p101
        %s207 = smul.u32 2, %s20
        %v208 = vld [vmem:[#allocation6] sm:$0xff]
        %v209 = vld [vmem:[#allocation6 + $0x8] sm:$0x1]
        %v210 = vld [vmem:[%s180] sm:$0xff]
        %v211 = vld [vmem:[%s180 + $0x8] sm:$0xff]
        %v212 = vld [vmem:[%s180 + $0x10] sm:$0xff]
        %v213 = vld [vmem:[%s180 + $0x18] sm:$0xff]
        %v214 = vld [vmem:[%s180 + $0x20] sm:$0xff]
        %v215 = vld [vmem:[%s180 + $0x28] sm:$0xff]
        %v216 = vld [vmem:[%s180 + $0x30] sm:$0xff]
        %v217 = vld [vmem:[%s180 + $0x38] sm:$0xff]
        %v218 = vld [vmem:[%s180 + $0x40] sm:$0xff]
        %v219 = vld [vmem:[%s180 + $0x48] sm:$0xff]
        %v220 = vld [vmem:[%s180 + $0x50] sm:$0xff]
        %v221 = vld [vmem:[%s180 + $0x58] sm:$0xff]
        %v222 = vld [vmem:[%s180 + $0x60] sm:$0xff]
        %v223 = vld [vmem:[%s180 + $0x68] sm:$0xff]
        %v224 = vld [vmem:[%s180 + $0x70] sm:$0xff]
        %v225 = vld [vmem:[%s180 + $0x78] sm:$0xff]
        %v226 = vld [vmem:[%s180 + $0x80] sm:$0xff]
        %v227 = vld [vmem:[%s180 + $0x88] sm:$0xff]
        %v228 = vld [vmem:[%s180 + $0x90] sm:$0xff]
        %v229 = vld [vmem:[%s180 + $0x98] sm:$0xff]
        %v230 = vld [vmem:[%s180 + $0xa0] sm:$0xff]
        %v231 = vld [vmem:[%s180 + $0xa8] sm:$0xff]
        %v232 = vld [vmem:[%s180 + $0xb0] sm:$0xff]
        %v233 = vld [vmem:[%s180 + $0xb8] sm:$0xff]
        %v234 = vld [vmem:[%s180 + $0xc0] sm:$0xff]
        %v235 = vld [vmem:[%s180 + $0xc8] sm:$0xff]
        %v236 = vld [vmem:[%s180 + $0xd0] sm:$0xff]
        %v237 = vld [vmem:[%s180 + $0xd8] sm:$0xff]
        %v238 = vld [vmem:[%s180 + $0xe0] sm:$0xff]
        %v239 = vld [vmem:[%s180 + $0xe8] sm:$0xff]
        %v240 = vld [vmem:[%s180 + $0xf0] sm:$0xff]
        %v241 = vld [vmem:[%s180 + $0xf8] sm:$0xff]
        %v242 = vld [vmem:[%s180 + $0x100] sm:$0xff]
        %v243 = vld [vmem:[%s180 + $0x108] sm:$0xff]
        %v244 = vld [vmem:[%s180 + $0x110] sm:$0xff]
        %v245 = vld [vmem:[%s180 + $0x118] sm:$0xff]
        %v246 = vld [vmem:[%s180 + $0x120] sm:$0xff]
        %v247 = vld [vmem:[%s180 + $0x128] sm:$0xff]
        %v248 = vld [vmem:[%s180 + $0x130] sm:$0xff]
        %v249 = vld [vmem:[%s180 + $0x138] sm:$0xff]
        %v250 = vld [vmem:[%s180 + $0x140] sm:$0xff]
        %v251 = vld [vmem:[%s180 + $0x148] sm:$0xff]
        %v252 = vld [vmem:[%s180 + $0x150] sm:$0xff]
        %v253 = vld [vmem:[%s180 + $0x158] sm:$0xff]
        %v254 = vld [vmem:[%s180 + $0x160] sm:$0xff]
        %v255 = vld [vmem:[%s180 + $0x168] sm:$0xff]
        %v256 = vld [vmem:[%s180 + $0x170] sm:$0xff]
        %v257 = vld [vmem:[%s180 + $0x178] sm:$0xff]
        %v258 = vld [vmem:[%s180 + $0x180] sm:$0xff]
        %v259 = vld [vmem:[%s180 + $0x188] sm:$0xff]
        %v260 = vld [vmem:[%s180 + $0x190] sm:$0xff]
        %v261 = vld [vmem:[%s180 + $0x198] sm:$0xff]
        %v262 = vld [vmem:[%s180 + $0x1a0] sm:$0xff]
        %v263 = vld [vmem:[%s180 + $0x1a8] sm:$0xff]
        %v264 = vld [vmem:[%s180 + $0x1b0] sm:$0xff]
        %v265 = vld [vmem:[%s180 + $0x1b8] sm:$0xff]
        %v266 = vld [vmem:[%s180 + $0x1c0] sm:$0xff]
        %v267 = vld [vmem:[%s180 + $0x1c8] sm:$0xff]
        %v268 = vld [vmem:[%s180 + $0x1d0] sm:$0xff]
        %v269 = vld [vmem:[%s180 + $0x1d8] sm:$0xff]
        %v270 = vld [vmem:[%s180 + $0x1e0] sm:$0xff]
        %v271 = vld [vmem:[%s180 + $0x1e8] sm:$0xff]
        %v272 = vld [vmem:[%s180 + $0x1f0] sm:$0xff]
        %v273 = vld [vmem:[%s180 + $0x1f8] sm:$0xff]
        %274 = vmatprep.subr.mxu0 %v211
        %275 = vmatpush1.msra.mxu0 %v210
        %276 = vmatprep.subr.mxu0 %v213
        %277 = vmatpush1.msra.mxu0 %v212
        %278 = vmatprep.subr.mxu0 %v215
        %279 = vmatpush1.msra.mxu0 %v214
        %280 = vmatprep.subr.mxu0 %v217
        %281 = vmatpush1.msra.mxu0 %v216
        %282 = vmatprep.subr.mxu0 %v219
        %283 = vmatpush1.msra.mxu0 %v218
        %284 = vmatprep.subr.mxu0 %v221
        %285 = vmatpush1.msra.mxu0 %v220
        %286 = vmatprep.subr.mxu0 %v223
        %287 = vmatpush1.msra.mxu0 %v222
        %288 = vmatprep.subr.mxu0 %v225
        %289 = vmatpush1.msra.mxu0 %v224
        %290 = vmatprep.subr.mxu0 %v227
        %291 = vmatpush1.msra.mxu0 %v226
        %292 = vmatprep.subr.mxu0 %v229
        %293 = vmatpush1.msra.mxu0 %v228
        %294 = vmatprep.subr.mxu0 %v231
        %295 = vmatpush1.msra.mxu0 %v230
        %296 = vmatprep.subr.mxu0 %v233
        %297 = vmatpush1.msra.mxu0 %v232
        %298 = vmatprep.subr.mxu0 %v235
        %299 = vmatpush1.msra.mxu0 %v234
        %300 = vmatprep.subr.mxu0 %v237
        %301 = vmatpush1.msra.mxu0 %v236
        %302 = vmatprep.subr.mxu0 %v239
        %303 = vmatpush1.msra.mxu0 %v238
        %304 = vmatprep.subr.mxu0 %v241
        %305 = vmatpush1.msra.mxu0 %v240
        %306 = vmatprep.subr.mxu0 0.0
        %307 = vmatpush1.msra.mxu0 0.0
        %308 = vmatprep.subr.mxu0 0.0
        %309 = vmatpush1.msra.mxu0 0.0
        %310 = vmatprep.subr.mxu0 0.0
        %311 = vmatpush1.msra.mxu0 0.0
        %312 = vmatprep.subr.mxu0 0.0
        %313 = vmatpush1.msra.mxu0 0.0
        %314 = vmatprep.subr.mxu0 0.0
        %315 = vmatpush1.msra.mxu0 0.0
        %316 = vmatprep.subr.mxu0 0.0
        %317 = vmatpush1.msra.mxu0 0.0
        %318 = vmatprep.subr.mxu0 0.0
        %319 = vmatpush1.msra.mxu0 0.0
        %320 = vmatprep.subr.mxu0 0.0
        %321 = vmatpush1.msra.mxu0 0.0
        %322 = vmatprep.subr.mxu0 0.0
        %323 = vmatpush1.msra.mxu0 0.0
        %324 = vmatprep.subr.mxu0 0.0
        %325 = vmatpush1.msra.mxu0 0.0
        %326 = vmatprep.subr.mxu0 0.0
        %327 = vmatpush1.msra.mxu0 0.0
        %328 = vmatprep.subr.mxu0 0.0
        %329 = vmatpush1.msra.mxu0 0.0
        %330 = vmatprep.subr.mxu0 0.0
        %331 = vmatpush1.msra.mxu0 0.0
        %332 = vmatprep.subr.mxu0 0.0
        %333 = vmatpush1.msra.mxu0 0.0
        %334 = vmatprep.subr.mxu0 0.0
        %335 = vmatpush1.msra.mxu0 0.0
        %336 = vmatprep.subr.mxu0 0.0
        %337 = vmatpush1.msra.mxu0 0.0
        %338 = vmatprep.mubr.f32.mxu0 0.0
        %339 = vmatmul.mubr.f32.gmra.mrb[0].mxu0 %v208
        %v340 = vpop.f32.mrb[0].mxu0
        %v341 = vadd.f32 0.0, %v340
        %v342 = vpop.f32.mrb[0].mxu0
        %v343 = vadd.f32 0.0, %v342
        %344 = vmatprep.mubr.f32.mxu0 0.0
        %345 = vmatmul.mubr.f32.gmra.mrb[0].mxu0 %v209
        %v346 = vpop.f32.mrb[0].mxu0
        %v347 = vadd.f32 0.0, %v346
        %v348 = vpop.f32.mrb[0].mxu0
        %349 = vdwg.mxu0
        %350 = vmatprep.subr.mxu0 %v243
        %351 = vmatpush1.msra.mxu0 %v242
        %352 = vmatprep.subr.mxu0 %v245
        %353 = vmatpush1.msra.mxu0 %v244
        %354 = vmatprep.subr.mxu0 %v247
        %355 = vmatpush1.msra.mxu0 %v246
        %356 = vmatprep.subr.mxu0 %v249
        %357 = vmatpush1.msra.mxu0 %v248
        %358 = vmatprep.subr.mxu0 %v251
        %359 = vmatpush1.msra.mxu0 %v250
        %360 = vmatprep.subr.mxu0 %v253
        %361 = vmatpush1.msra.mxu0 %v252
        %362 = vmatprep.subr.mxu0 %v255
        %363 = vmatpush1.msra.mxu0 %v254
        %364 = vmatprep.subr.mxu0 %v257
        %365 = vmatpush1.msra.mxu0 %v256
        %366 = vmatprep.subr.mxu0 %v259
        %367 = vmatpush1.msra.mxu0 %v258
        %368 = vmatprep.subr.mxu0 %v261
        %369 = vmatpush1.msra.mxu0 %v260
        %370 = vmatprep.subr.mxu0 %v263
        %371 = vmatpush1.msra.mxu0 %v262
        %372 = vmatprep.subr.mxu0 %v265
        %373 = vmatpush1.msra.mxu0 %v264
        %374 = vmatprep.subr.mxu0 %v267
        %375 = vmatpush1.msra.mxu0 %v266
        %376 = vmatprep.subr.mxu0 %v269
        %377 = vmatpush1.msra.mxu0 %v268
        %378 = vmatprep.subr.mxu0 %v271
        %379 = vmatpush1.msra.mxu0 %v270
        %380 = vmatprep.subr.mxu0 %v273
        %381 = vmatpush1.msra.mxu0 %v272
        %382 = vmatprep.subr.mxu0 0.0
        %383 = vmatpush1.msra.mxu0 0.0
        %384 = vmatprep.subr.mxu0 0.0
        %385 = vmatpush1.msra.mxu0 0.0
        %386 = vmatprep.subr.mxu0 0.0
        %387 = vmatpush1.msra.mxu0 0.0
        %388 = vmatprep.subr.mxu0 0.0
        %389 = vmatpush1.msra.mxu0 0.0
        %390 = vmatprep.subr.mxu0 0.0
        %391 = vmatpush1.msra.mxu0 0.0
        %392 = vmatprep.subr.mxu0 0.0
        %393 = vmatpush1.msra.mxu0 0.0
        %394 = vmatprep.subr.mxu0 0.0
        %395 = vmatpush1.msra.mxu0 0.0
        %396 = vmatprep.subr.mxu0 0.0
        %397 = vmatpush1.msra.mxu0 0.0
        %398 = vmatprep.subr.mxu0 0.0
        %399 = vmatpush1.msra.mxu0 0.0
        %400 = vmatprep.subr.mxu0 0.0
        %401 = vmatpush1.msra.mxu0 0.0
        %402 = vmatprep.subr.mxu0 0.0
        %403 = vmatpush1.msra.mxu0 0.0
        %404 = vmatprep.subr.mxu0 0.0
        %405 = vmatpush1.msra.mxu0 0.0
        %406 = vmatprep.subr.mxu0 0.0
        %407 = vmatpush1.msra.mxu0 0.0
        %408 = vmatprep.subr.mxu0 0.0
        %409 = vmatpush1.msra.mxu0 0.0
        %410 = vmatprep.subr.mxu0 0.0
        %411 = vmatpush1.msra.mxu0 0.0
        %412 = vmatprep.subr.mxu0 0.0
        %413 = vmatpush1.msra.mxu0 0.0
        %414 = vmatprep.mubr.f32.mxu0 0.0
        %415 = vmatmul.mubr.f32.gmra.mrb[0].mxu0 %v208
        %v416 = vpop.f32.mrb[0].mxu0
        %v417 = vadd.f32 0.0, %v416
        %v418 = vpop.f32.mrb[0].mxu0
        %v419 = vadd.f32 0.0, %v418
        %420 = vmatprep.mubr.f32.mxu0 0.0
        %421 = vmatmul.mubr.f32.gmra.mrb[0].mxu0 %v209
        %v422 = vpop.f32.mrb[0].mxu0
        %v423 = vadd.f32 0.0, %v422
        %v424 = vpop.f32.mrb[0].mxu0
        %425 = vdwg.mxu0
        %v426 = vadd.f32 %v341, 0.0
        %v427 = vadd.f32 %v343, 0.0
        %v428 = vadd.f32 %v417, 0.0
        %v429 = vadd.f32 %v419, 0.0
        %v434 = vrot.slane %v341, 1
        %v435 = vrot.slane %v343, 1
        %v436 = vrot.slane %v417, 1
        %v437 = vrot.slane %v419, 1
        %438 = vrot.lane.b32.xlu0 %v434, 1
        %v439 = vpop.permute.xlu0 %438
        %440 = vrot.lane.b32.xlu0 %v435, 1
        %v441 = vpop.permute.xlu0 %440
        %442 = vrot.lane.b32.xlu0 %v436, 1
        %v443 = vpop.permute.xlu0 %442
        %444 = vrot.lane.b32.xlu0 %v437, 1
        %v445 = vpop.permute.xlu0 %444
        %vm446 = vcmask 7168
        %v447 = vsel %vm446, %v439, %v441
        %v448 = vsel %vm446, %v443, %v445
        %v453 = vadd.f32 %v426, %v439
        %v454 = vadd.f32 %v427, %v447
        %v455 = vadd.f32 %v428, %v443
        %v456 = vadd.f32 %v429, %v448
        %v457 = vrot.slane %v341, 2
        %v458 = vrot.slane %v343, 2
        %v459 = vrot.slane %v417, 2
        %v460 = vrot.slane %v419, 2
        %461 = vrot.lane.b32.xlu0 %v457, 2
        %v462 = vpop.permute.xlu0 %461
        %463 = vrot.lane.b32.xlu0 %v458, 2
        %v464 = vpop.permute.xlu0 %463
        %465 = vrot.lane.b32.xlu0 %v459, 2
        %v466 = vpop.permute.xlu0 %465
        %467 = vrot.lane.b32.xlu0 %v460, 2
        %v468 = vpop.permute.xlu0 %467
        %vm469 = vcmask 15360
        %v470 = vsel %vm469, %v462, %v464
        %v471 = vsel %vm469, %v466, %v468
        %v476 = vadd.f32 %v453, %v462
        %v477 = vadd.f32 %v454, %v470
        %v478 = vadd.f32 %v455, %v466
        %v479 = vadd.f32 %v456, %v471
        %v480 = vrot.slane %v341, 3
        %v481 = vrot.slane %v343, 3
        %v482 = vrot.slane %v417, 3
        %v483 = vrot.slane %v419, 3
        %484 = vrot.lane.b32.xlu0 %v480, 8
        %v485 = vpop.permute.xlu0 %484
        %486 = vrot.lane.b32.xlu0 %v481, 8
        %v487 = vpop.permute.xlu0 %486
        %488 = vrot.lane.b32.xlu0 %v482, 8
        %v489 = vpop.permute.xlu0 %488
        %490 = vrot.lane.b32.xlu0 %v483, 8
        %v491 = vpop.permute.xlu0 %490
        %vm492 = vcmask 64512
        %v493 = vsel %vm492, %v485, %v487
        %v494 = vsel %vm492, %v489, %v491
        %v499 = vadd.f32 %v476, %v485
        %v500 = vadd.f32 %v477, %v493
        %v501 = vadd.f32 %v478, %v489
        %v502 = vadd.f32 %v479, %v494
        %v503 = vrot.slane %v341, 4
        %v504 = vrot.slane %v343, 4
        %v505 = vrot.slane %v417, 4
        %v506 = vrot.slane %v419, 4
        %507 = vrot.lane.b32.xlu0 %v503, 9
        %v508 = vpop.permute.xlu0 %507
        %509 = vrot.lane.b32.xlu0 %v504, 9
        %v510 = vpop.permute.xlu0 %509
        %511 = vrot.lane.b32.xlu0 %v505, 9
        %v512 = vpop.permute.xlu0 %511
        %513 = vrot.lane.b32.xlu0 %v506, 9
        %v514 = vpop.permute.xlu0 %513
        %vm515 = vcmask 72704
        %v516 = vsel %vm515, %v508, %v510
        %v517 = vsel %vm515, %v512, %v514
        %v522 = vadd.f32 %v499, %v508
        %v523 = vadd.f32 %v500, %v516
        %v524 = vadd.f32 %v501, %v512
        %v525 = vadd.f32 %v502, %v517
        %v526 = vrot.slane %v341, 5
        %v527 = vrot.slane %v343, 5
        %v528 = vrot.slane %v417, 5
        %v529 = vrot.slane %v419, 5
        %530 = vrot.lane.b32.xlu0 %v526, 10
        %v531 = vpop.permute.xlu0 %530
        %532 = vrot.lane.b32.xlu0 %v527, 10
        %v533 = vpop.permute.xlu0 %532
        %534 = vrot.lane.b32.xlu0 %v528, 10
        %v535 = vpop.permute.xlu0 %534
        %536 = vrot.lane.b32.xlu0 %v529, 10
        %v537 = vpop.permute.xlu0 %536
        %vm538 = vcmask 80896
        %v539 = vsel %vm538, %v531, %v533
        %v540 = vsel %vm538, %v535, %v537
        %v545 = vadd.f32 %v522, %v531
        %v546 = vadd.f32 %v523, %v539
        %v547 = vadd.f32 %v524, %v535
        %v548 = vadd.f32 %v525, %v540
        %v549 = vrot.slane %v341, 6
        %v550 = vrot.slane %v343, 6
        %v551 = vrot.slane %v417, 6
        %v552 = vrot.slane %v419, 6
        %553 = vrot.lane.b32.xlu0 %v549, 16
        %v554 = vpop.permute.xlu0 %553
        %555 = vrot.lane.b32.xlu0 %v550, 16
        %v556 = vpop.permute.xlu0 %555
        %557 = vrot.lane.b32.xlu0 %v551, 16
        %v558 = vpop.permute.xlu0 %557
        %559 = vrot.lane.b32.xlu0 %v552, 16
        %v560 = vpop.permute.xlu0 %559
        %vm561 = vcmask 130048
        %v562 = vsel %vm561, %v554, %v556
        %v563 = vsel %vm561, %v558, %v560
        %v568 = vadd.f32 %v545, %v554
        %v569 = vadd.f32 %v546, %v562
        %v570 = vadd.f32 %v547, %v558
        %v571 = vadd.f32 %v548, %v563
        %v572 = vrot.slane %v341, 7
        %v573 = vrot.slane %v343, 7
        %v574 = vrot.slane %v417, 7
        %v575 = vrot.slane %v419, 7
        %576 = vrot.lane.b32.xlu0 %v572, 17
        %v577 = vpop.permute.xlu0 %576
        %578 = vrot.lane.b32.xlu0 %v573, 17
        %v579 = vpop.permute.xlu0 %578
        %580 = vrot.lane.b32.xlu0 %v574, 17
        %v581 = vpop.permute.xlu0 %580
        %582 = vrot.lane.b32.xlu0 %v575, 17
        %v583 = vpop.permute.xlu0 %582
        %vm584 = vcmask 138240
        %v585 = vsel %vm584, %v577, %v579
        %v586 = vsel %vm584, %v581, %v583
        %v591 = vadd.f32 %v568, %v577
        %v592 = vadd.f32 %v569, %v585
        %v593 = vadd.f32 %v570, %v581
        %v594 = vadd.f32 %v571, %v586
        %597 = vrot.lane.b32.xlu0 %v347, 18
        %v598 = vpop.permute.xlu0 %597
        %599 = vrot.lane.b32.xlu0 %v423, 18
        %v600 = vpop.permute.xlu0 %599
        %v603 = vadd.f32 %v591, %v598
        %v604 = vadd.f32 %v592, %v598
        %v605 = vadd.f32 %v593, %v600
        %v606 = vadd.f32 %v594, %v600
        %s607 = smul.u32 %s20, 2
        %612 = vrot.lane.b32.xlu0 %v603, 110
        %v613 = vpop.permute.xlu0 %612
        %614 = vrot.lane.b32.xlu0 %v604, 110
        %v615 = vpop.permute.xlu0 %614
        %616 = vrot.lane.b32.xlu0 %v605, 110
        %v617 = vpop.permute.xlu0 %616
        %618 = vrot.lane.b32.xlu0 %v606, 110
        %v619 = vpop.permute.xlu0 %618
        %vm620 = vcmask 900096
        %v621 = vsel %vm620, %v613, %v615
        %v622 = vsel %vm620, %v617, %v619
        %s625 = scalar_lea.vmem [#allocation9], %s607
        %626 = vst [vmem:[%s625] sm:$0x1] %v621
        %627 = vst [vmem:[%s625 + $0x1] sm:$0x1] %v622
        %p628 = scmp.eq.s32.totalorder %s20, 1
        // Predicated region
        $region45: #{tpu_custom_call.1} parent=31 // pred_check
          %p629 = pneg %p628
        $region46: #{tpu_custom_call.1} parent=31 // pred_check_branch
          %631 = sbr.rel (%p629) target = $region48
        $region47: #{tpu_custom_call.1} parent=31 // pred_region
          %s632 = sld [smem:[#allocation8]]
          %s633 = sld [smem:[#allocation8 + $0x1]]
          %s634 = sld [smem:[#allocation8 + $0x2]]
          %v635 = vld [vmem:[#allocation9] sm:$0x1]
          %v636 = vld [vmem:[#allocation9 + $0x1] sm:$0x1]
          %v637 = vld [vmem:[#allocation9 + $0x2] sm:$0x1]
          %v638 = vld [vmem:[#allocation9 + $0x3] sm:$0x1]
          %vm639 = vcmask 516096
          %v640 = vsel %vm639, %v635, 0.0
          %v641 = vsel %vm639, %v636, 0.0
          %v642 = vadd.f32 %v640, %v641
          %v643 = vsel %vm639, %v637, 0.0
          %v644 = vadd.f32 %v642, %v643
          %v645 = vsel %vm639, %v638, 0.0
          %v646 = vadd.f32 %v644, %v645
          %647 = vadd.xlane.f32.xlu0 %v646
          %v648 = vpop.xlane.xlu0 %647
          %v649 = vrot.slane %v648, 4
          %v650 = vadd.f32 %v648, %v649
          %v651 = vrot.slane %v650, 2
          %v652 = vadd.f32 %v650, %v651
          %v653 = vrot.slane %v652, 1
          %v654 = vadd.f32 %v652, %v653
          %s655 = vtos %v654
          %v656 = vrcp.pop 256.0
          %s657 = vtos %v656
          %s658 = smul.f32 %s655, %s657
          %v659 = vstv %s658
          %v660 = vsub.f32 %v635, %v659
          %v661 = vsub.f32 %v636, %v659
          %v662 = vsub.f32 %v637, %v659
          %v663 = vsub.f32 %v638, %v659
          %v664 = vmul.f32 %v660, %v660
          %v665 = vmul.f32 %v661, %v661
          %v666 = vmul.f32 %v662, %v662
          %v667 = vmul.f32 %v663, %v663
          %v668 = vsel %vm639, %v664, 0.0
          %v669 = vsel %vm639, %v665, 0.0
          %v670 = vadd.f32 %v668, %v669
          %v671 = vsel %vm639, %v666, 0.0
          %v672 = vadd.f32 %v670, %v671
          %v673 = vsel %vm639, %v667, 0.0
          %v674 = vadd.f32 %v672, %v673
          %675 = vadd.xlane.f32.xlu0 %v674
          %v676 = vpop.xlane.xlu0 %675
          %v677 = vrot.slane %v676, 4
          %v678 = vadd.f32 %v676, %v677
          %v679 = vrot.slane %v678, 2
          %v680 = vadd.f32 %v678, %v679
          %v681 = vrot.slane %v680, 1
          %v682 = vadd.f32 %v680, %v681
          %s683 = vtos %v682
          %v684 = vrcp.pop 256.0
          %s685 = vtos %v684
          %s686 = smul.f32 %s683, %s685
          %s687 = sadd.f32 %s686, %s634
          %v688 = vstv %s687
          %v689 = vrsqrt.pop %v688
          %s690 = vtos %v689
          %v691 = vstv %s690
          %v692 = vmul.f32 %v660, %v691
          %v693 = vmul.f32 %v661, %v691
          %v694 = vmul.f32 %v662, %v691
          %v695 = vmul.f32 %v663, %v691
          %v696 = vstv %s632
          %v697 = vmul.f32 %v692, %v696
          %v698 = vmul.f32 %v693, %v696
          %v699 = vmul.f32 %v694, %v696
          %v700 = vmul.f32 %v695, %v696
          %v701 = vstv %s633
          %v702 = vadd.f32 %v697, %v701
          %v703 = vadd.f32 %v698, %v701
          %v704 = vadd.f32 %v699, %v701
          %v705 = vadd.f32 %v700, %v701
          %706 = vst [vmem:[#allocation9] sm:$0x1] %v702
          %707 = vst [vmem:[#allocation9 + $0x1] sm:$0x1] %v703
          %708 = vst [vmem:[#allocation9 + $0x2] sm:$0x1] %v704
          %709 = vst [vmem:[#allocation9 + $0x3] sm:$0x1] %v705
        $region48: #{tpu_custom_call.1} parent=31 // pred_fallthru
          _
        // Predicated region
        $region49: #{tpu_custom_call.1} parent=31 // pred_check
          %p710 = pneg %p101
        $region50: #{tpu_custom_call.1} parent=31 // pred_check_branch
          %712 = sbr.rel (%p710) target = $region52
        $region51: #{tpu_custom_call.1} parent=31 // pred_region
          %s714 = ssub.s32 64, 64
          %715 = vsyncadd [#allocation4], %s714
          %s716 = sshll.u32 [#allocation9], 4
          %s717 = int_to_ptr.vmem [resolvable:$true] %s716
          %722 = dma.vmem_to_hbm [thread:$0]  %s717, 64, %s3, [#allocation4], 16, 16, 1
        $region52: #{tpu_custom_call.1} parent=31 // pred_fallthru
          _
        // Predicated region
        $region53: #{tpu_custom_call.1} parent=31 // pred_check
          %p723 = pneg %p101
        $region54: #{tpu_custom_call.1} parent=31 // pred_check_branch
          %725 = sbr.rel (%p723) target = $region56
        $region55: #{tpu_custom_call.1} parent=31 // pred_region
          %726 = dma.done [#allocation4], 64
        $region56: #{tpu_custom_call.1} parent=31 // pred_fallthru
          _
      $region32: #{tpu_custom_call.1} parent=5 // pred_fallthru
        _
      %p727 = scmp.le.s32.totalorder 2, %s15
      // Predicated region
      $region57: #{tpu_custom_call.1} parent=5 // pred_check
        %p728 = pneg %p727
      $region58: #{tpu_custom_call.1} parent=5 // pred_check_branch
        %730 = sbr.rel (%p728) target = $region60
      $region59: #{tpu_custom_call.1} parent=5 // pred_region
        %s731 = ssub.s32 %s15, 2
      $region60: #{tpu_custom_call.1} parent=5 // pred_fallthru
        _
    $region6: #{tpu_custom_call.1} parent=1 // loop_footer
      %s19 = sadd.s32 1, %s15
    $region7: #{tpu_custom_call.1} parent=1 // loop_footer_branch
      %14 = sbr.rel target = $region3
    $region8: #{tpu_custom_call.1} parent=1 // loop_exit
      _
    %732 = vsyncpa [#allocation3], 1
    %s733 = scalar_lea.sflag [#allocation3], 1
    %734 = vsyncpa %s733, 1
    %735 = vsyncpa [#allocation7], 1
    %736 = vsyncpa [#allocation4], 1
    %s737 = scalar_lea.sflag [#allocation4], 1
    %738 = vsyncpa %s737, 1
    %739 = vsyncpa [#allocation5], 1
    %s740 = scalar_lea.sflag [#allocation5], 1
    %741 = vsyncpa %s740, 1

</llo_original>
